<compile_context>
chip_gen: v7x
topology: tpu7x:2x2x1
jax: 0.10.0
libtpu: 0.0.40
codegen_flags: <defaults>
</compile_context>

<pallas_src>
import jax
import jax.numpy as jnp
from jax.experimental import pallas as pl
from jax.experimental.pallas import tpu as pltpu


def _round_up(x, m):
    return ((x + m - 1) // m) * m


def decoder_kernel(x_ref, w1_ref, b1_ref, w2_ref, b2_ref, o_ref):
    # fc1: (tm, K) @ (K, mdim), f32 accumulation on the MXU, bias + tanh in f32.
    h = jnp.dot(x_ref[...], w1_ref[...], preferred_element_type=jnp.float32)
    h = jnp.tanh(h + b1_ref[...])
    # fc2: (tm, mdim) @ (mdim, odim_p), f32 accumulation, bias + sigmoid in f32.
    y = jnp.dot(h.astype(w2_ref.dtype), w2_ref[...],
                preferred_element_type=jnp.float32) + b2_ref[...]
    o_ref[...] = jax.nn.sigmoid(y).astype(o_ref.dtype)


def decoder_forward(z_content, z_style, w1, b1, w2, b2, *, tm_max=256):
    """Pallas forward pass of the Decoder.

    z_content: (B, cdim)   z_style: (B, sdim)
    w1: (cdim+sdim, mdim)  b1: (mdim,)     # weights stored (in, out), i.e. x @ W + b
    w2: (mdim, 784)        b2: (784,)
    returns: (B, 784) float32
    """
    B, cdim = z_content.shape
    _, sdim = z_style.shape
    K = cdim + sdim
    mdim = w1.shape[1]
    odim = w2.shape[1]
    odim_p = _round_up(odim, 128)           # 784 -> 896: lane-dense output stores

    # Concat once in the wrapper -> single MXU contraction of depth K.
    x = jnp.concatenate([z_content, z_style], axis=1)

    # Batch tiling: tm rows per grid step, sublane-aligned; pad B if needed.
    if B >= tm_max:
        tm = tm_max
    else:
        tm = _round_up(max(B, 1), 8)
    Bp = _round_up(B, tm)
    if Bp != B:
        x = jnp.pad(x, ((0, Bp - B), (0, 0)))

    # bf16 for MXU operands (weights cast once here so w2 is DMA'd as bf16).
    x_bf = x.astype(jnp.bfloat16)
    w1_bf = w1.astype(jnp.bfloat16)                                        # (K, mdim)
    w2_bf = jnp.pad(w2, ((0, 0), (0, odim_p - odim))).astype(jnp.bfloat16)  # (mdim, odim_p)
    b1_2d = b1.reshape(1, mdim).astype(jnp.float32)
    b2_2d = jnp.pad(b2, (0, odim_p - odim)).reshape(1, odim_p).astype(jnp.float32)

    grid = (Bp // tm,)

    cost = pl.CostEstimate(
        flops=2 * Bp * K * mdim + 2 * Bp * mdim * odim_p,
        transcendentals=Bp * (mdim + odim_p),
        bytes_accessed=(x_bf.size * 2 + w1_bf.size * 2 + w2_bf.size * 2
                        + b1_2d.size * 4 + b2_2d.size * 4 + Bp * odim_p * 4),
    )

    out_p = pl.pallas_call(
        decoder_kernel,
        out_shape=jax.ShapeDtypeStruct((Bp, odim_p), jnp.float32),
        grid=grid,
        in_specs=[
            # Activations: tiled over the batch axis.
            pl.BlockSpec((tm, K), lambda i: (i, 0)),
            # Weights / biases: constant block index -> resident in VMEM across steps.
            pl.BlockSpec((K, mdim), lambda i: (0, 0)),
            pl.BlockSpec((1, mdim), lambda i: (0, 0)),
            pl.BlockSpec((mdim, odim_p), lambda i: (0, 0)),
            pl.BlockSpec((1, odim_p), lambda i: (0, 0)),
        ],
        out_specs=pl.BlockSpec((tm, odim_p), lambda i: (i, 0)),
        compiler_params=pltpu.CompilerParams(
            dimension_semantics=("parallel",),
            vmem_limit_bytes=64 * 1024 * 1024,
        ),
        cost_estimate=cost,
    )(x_bf, w1_bf, b1_2d, w2_bf, b2_2d)

    return out_p[:B, :odim]


def decoder_ref(z_content, z_style, w1, b1, w2, b2):
    x = jnp.concatenate([z_content, z_style], axis=1)
    h = jnp.tanh(x @ w1 + b1)
    return jax.nn.sigmoid(h @ w2 + b2)


if __name__ == "__main__":
    # Small shapes consistent with the module: mdim=32, cdim=16, sdim=16, batch=8.
    B, cdim, sdim, mdim, odim = 8, 16, 16, 32, 784

    key = jax.random.PRNGKey(0)
    k_zc, k_zs, k_w1, k_b1, k_w2, k_b2 = jax.random.split(key, 6)

    z_content = jax.random.normal(k_zc, (B, cdim), dtype=jnp.float32)
    z_style = jax.random.normal(k_zs, (B, sdim), dtype=jnp.float32)

    # Deterministic synthetic parameters (PyTorch-like uniform init, stored as (in, out)).
    lim1 = 1.0 / jnp.sqrt(cdim + sdim)
    lim2 = 1.0 / jnp.sqrt(mdim)
    w1 = jax.random.uniform(k_w1, (cdim + sdim, mdim), minval=-lim1, maxval=lim1, dtype=jnp.float32)
    b1 = jax.random.uniform(k_b1, (mdim,), minval=-lim1, maxval=lim1, dtype=jnp.float32)
    w2 = jax.random.uniform(k_w2, (mdim, odim), minval=-lim2, maxval=lim2, dtype=jnp.float32)
    b2 = jax.random.uniform(k_b2, (odim,), minval=-lim2, maxval=lim2, dtype=jnp.float32)

    out = decoder_forward(z_content, z_style, w1, b1, w2, b2)
    out = jax.block_until_ready(out)

    ref = decoder_ref(z_content, z_style, w1, b1, w2, b2)
    assert out.shape == (B, odim)
    # bf16 MXU operands with f32 accumulation: allow ~1e-2 absolute slack vs f32 ref.
    assert jnp.allclose(out, ref, atol=2e-2, rtol=2e-2), "mismatch vs JAX reference"

    print("KERNEL_OK")
</pallas_src>

<mosaic_0001>
module attributes {stable_mosaic.version = 11 : i64} {
  func.func @decoder_kernel(%arg0: i32, %arg1: memref<8x32xbf16, #tpu.memory_space<vmem>>, %arg2: memref<32x32xbf16, #tpu.memory_space<vmem>>, %arg3: memref<1x32xf32, #tpu.memory_space<vmem>>, %arg4: memref<32x896xbf16, #tpu.memory_space<vmem>>, %arg5: memref<1x896xf32, #tpu.memory_space<vmem>>, %arg6: memref<8x896xf32, #tpu.memory_space<vmem>>) attributes {dimension_semantics = [#tpu.dimension_semantics<parallel>], iteration_bounds = array<i64: 1>, scalar_prefetch = 0 : i64, scratch_operands = 0 : i64, tpu.core_type = #tpu.core_type<tc>, window_params = [{transform_indices = @transform_0, window_bounds = array<i64: 8, 32>}, {pipeline_mode = #tpu.pipeline_mode<synchronous>, transform_indices = @transform_1, window_bounds = array<i64: 32, 32>}, {pipeline_mode = #tpu.pipeline_mode<synchronous>, transform_indices = @transform_2, window_bounds = array<i64: 1, 32>}, {pipeline_mode = #tpu.pipeline_mode<synchronous>, transform_indices = @transform_3, window_bounds = array<i64: 32, 896>}, {pipeline_mode = #tpu.pipeline_mode<synchronous>, transform_indices = @transform_4, window_bounds = array<i64: 1, 896>}, {transform_indices = @transform_5, window_bounds = array<i64: 8, 896>}]} {
    %c0 = arith.constant 0 : index
    %c0_0 = arith.constant 0 : index
    %0 = vector.load %arg1[%c0, %c0_0] : memref<8x32xbf16, #tpu.memory_space<vmem>>, vector<8x32xbf16>
    %c0_1 = arith.constant 0 : index
    %c0_2 = arith.constant 0 : index
    %1 = vector.load %arg2[%c0_1, %c0_2] : memref<32x32xbf16, #tpu.memory_space<vmem>>, vector<32x32xbf16>
    %cst = arith.constant dense<0.000000e+00> : vector<8x32xf32>
    %2 = tpu.matmul %0, %1, %cst {dimension_numbers = #tpu.dot_dimension_numbers<[1], [0], [0], [1], [0, 0, 1, 1], [], []>} : vector<8x32xbf16>, vector<32x32xbf16>, vector<8x32xf32> -> vector<8x32xf32>
    %c0_3 = arith.constant 0 : index
    %c0_4 = arith.constant 0 : index
    %3 = vector.load %arg3[%c0_3, %c0_4] : memref<1x32xf32, #tpu.memory_space<vmem>>, vector<1x32xf32>
    %4 = vector.broadcast %3 : vector<1x32xf32> to vector<8x32xf32>
    %5 = arith.addf %2, %4 : vector<8x32xf32>
    %6 = math.tanh %5 : vector<8x32xf32>
    %7 = arith.truncf %6 : vector<8x32xf32> to vector<8x32xbf16>
    %c0_5 = arith.constant 0 : index
    %c0_6 = arith.constant 0 : index
    %8 = vector.load %arg4[%c0_5, %c0_6] : memref<32x896xbf16, #tpu.memory_space<vmem>>, vector<32x896xbf16>
    %cst_7 = arith.constant dense<0.000000e+00> : vector<8x896xf32>
    %9 = tpu.matmul %7, %8, %cst_7 {dimension_numbers = #tpu.dot_dimension_numbers<[1], [0], [0], [1], [0, 0, 1, 1], [], []>} : vector<8x32xbf16>, vector<32x896xbf16>, vector<8x896xf32> -> vector<8x896xf32>
    %c0_8 = arith.constant 0 : index
    %c0_9 = arith.constant 0 : index
    %10 = vector.load %arg5[%c0_8, %c0_9] : memref<1x896xf32, #tpu.memory_space<vmem>>, vector<1x896xf32>
    %11 = vector.broadcast %10 : vector<1x896xf32> to vector<8x896xf32>
    %12 = arith.addf %9, %11 : vector<8x896xf32>
    %13 = arith.negf %12 : vector<8x896xf32>
    %14 = math.exp %13 : vector<8x896xf32>
    %cst_10 = arith.constant 1.000000e+00 : f32
    %15 = vector.broadcast %cst_10 : f32 to vector<8x896xf32>
    %16 = arith.addf %15, %14 : vector<8x896xf32>
    %17 = arith.divf %15, %16 : vector<8x896xf32>
    %c0_11 = arith.constant 0 : index
    %c0_12 = arith.constant 0 : index
    %18 = vector.load %arg6[%c0_11, %c0_12] : memref<8x896xf32, #tpu.memory_space<vmem>>, vector<8x896xf32>
    tpu.vector_store %arg6[%c0_11, %c0_12], %17 {strides = array<i32>} : memref<8x896xf32, #tpu.memory_space<vmem>>, vector<8x896xf32>,
    return
  }
  func.func @transform_0(%arg0: i32) -> (i32, i32) {
    %c0_i32 = arith.constant 0 : i32
    %c0_i32_0 = arith.constant 0 : i32
    return %arg0, %c0_i32 : i32, i32
  }
  func.func @transform_1(%arg0: i32) -> (i32, i32) {
    %c0_i32 = arith.constant 0 : i32
    %c0_i32_0 = arith.constant 0 : i32
    %c0_i32_1 = arith.constant 0 : i32
    return %c0_i32, %c0_i32_0 : i32, i32
  }
  func.func @transform_2(%arg0: i32) -> (i32, i32) {
    %c0_i32 = arith.constant 0 : i32
    %c0_i32_0 = arith.constant 0 : i32
    %c0_i32_1 = arith.constant 0 : i32
    return %c0_i32, %c0_i32_0 : i32, i32
  }
  func.func @transform_3(%arg0: i32) -> (i32, i32) {
    %c0_i32 = arith.constant 0 : i32
    %c0_i32_0 = arith.constant 0 : i32
    %c0_i32_1 = arith.constant 0 : i32
    return %c0_i32, %c0_i32_0 : i32, i32
  }
  func.func @transform_4(%arg0: i32) -> (i32, i32) {
    %c0_i32 = arith.constant 0 : i32
    %c0_i32_0 = arith.constant 0 : i32
    %c0_i32_1 = arith.constant 0 : i32
    return %c0_i32, %c0_i32_0 : i32, i32
  }
  func.func @transform_5(%arg0: i32) -> (i32, i32) {
    %c0_i32 = arith.constant 0 : i32
    %c0_i32_0 = arith.constant 0 : i32
    return %arg0, %c0_i32 : i32, i32
  }
}

</mosaic_0001>

<llo_original>
// kernel: tpu_custom_call.1
$region0: #{tpu_custom_call.1}
  #allocation0 [shape = 'u32[]', space=smem, size = 0x4, offset = 0x4, fixed_abs, tag = 'smem constant byte address 0x4 - core index']
  #allocation1 [shape = 'u32[144,128]{1,0:T(1,128)}', space=vmem, size = 0x12000, scoped, tag = 'internal scratch']
  %s0 = inlined_call_operand.hbm [shape: bf16[8,32], index: 0, kind: input, shape index: {}]
  %s1 = inlined_call_operand.hbm [shape: bf16[32,32], index: 1, kind: input, shape index: {}]
  %s2 = inlined_call_operand.hbm [shape: f32[1,32], index: 2, kind: input, shape index: {}]
  %s3 = inlined_call_operand.hbm [shape: bf16[32,896], index: 3, kind: input, shape index: {}]
  %s4 = inlined_call_operand.hbm [shape: f32[1,896], index: 4, kind: input, shape index: {}]
  %s5 = inlined_call_operand.hbm [shape: f32[8,896], index: 5, kind: output, shape index: {}]
  %s6 = sld [smem:[#allocation0]]
  $region50: #{tpu_custom_call.1} parent=0
    _
  %s8 = ssub.s32 1, %s6
  %s9 = scalar_select 0, %s8, %s6
  $region1: #{tpu_custom_call.1} parent=0
    #allocation2 [shape = 'u8[2048]{0}', space=vmem, size = 0x800, scoped, tag = 'input window, operand 0, single buffered']
    #allocation3 [shape = 's32[1]{0}', space=sflag, size = 0x4, scoped, tag = 'scoped memory for tpu_custom_call.1']
    #allocation4 [shape = 's32[1]{0}', space=sflag, size = 0x4, scoped, tag = 'scoped memory for tpu_custom_call.1']
    #allocation5 [shape = 'u8[8192]{0}', space=vmem, size = 0x2000, scoped, tag = 'input window, operand 1, single buffered']
    #allocation6 [shape = 's32[1]{0}', space=sflag, size = 0x4, scoped, tag = 'scoped memory for tpu_custom_call.1']
    #allocation7 [shape = 'u8[512]{0}', space=vmem, size = 0x400, scoped, tag = 'input window, operand 2, single buffered']
    #allocation8 [shape = 'u8[57344]{0}', space=vmem, size = 0xe000, scoped, tag = 'input window, operand 3, single buffered']
    #allocation9 [shape = 's32[1]{0}', space=sflag, size = 0x4, scoped, tag = 'scoped memory for tpu_custom_call.1']
    #allocation10 [shape = 'u8[3584]{0}', space=vmem, size = 0x1000, scoped, tag = 'input window, operand 4, single buffered']
    #allocation11 [shape = 'u8[28672]{0}', space=vmem, size = 0x7000, scoped, tag = 'output window, operand 0, single buffered']
    %10 = vsyncpa [#allocation3], 0
    %11 = vsyncpa [#allocation6], 0
    %12 = vsyncpa [#allocation9], 0
    %13 = vsyncpa [#allocation4], 0
    // Predicated region
    $region2: #{tpu_custom_call.1} parent=1 // pred_check
      _
    $region3: #{tpu_custom_call.1} parent=1 // pred_check_branch
      %15 = sbr.rel (0) target = $region5
    $region4: #{tpu_custom_call.1} parent=1 // pred_region
      %s17 = ssub.s32 64, 64
      %18 = vsyncadd [#allocation3], %s17
      %s20 = sshll.u32 [#allocation2], 4
      %s21 = int_to_ptr.vmem [resolvable:$true] %s20
      %23 = dma.hbm_to_vmem [thread:$0]  %s0, 64, %s21, [#allocation3]
    $region5: #{tpu_custom_call.1} parent=1 // pred_fallthru
      _
    // Predicated region
    $region6: #{tpu_custom_call.1} parent=1 // pred_check
      _
    $region7: #{tpu_custom_call.1} parent=1 // pred_check_branch
      %25 = sbr.rel (0) target = $region9
    $region8: #{tpu_custom_call.1} parent=1 // pred_region
      %s27 = ssub.s32 256, 256
      %28 = vsyncadd [#allocation6], %s27
      %s29 = sshll.u32 [#allocation5], 4
      %s30 = int_to_ptr.vmem [resolvable:$true] %s29
      %35 = dma.hbm_to_vmem [thread:$0]  %s1, 256, %s30, [#allocation6], 64, 64, 4
    $region9: #{tpu_custom_call.1} parent=1 // pred_fallthru
      _
    // Predicated region
    $region10: #{tpu_custom_call.1} parent=1 // pred_check
      _
    $region11: #{tpu_custom_call.1} parent=1 // pred_check_branch
      %37 = sbr.rel (0) target = $region13
    $region12: #{tpu_custom_call.1} parent=1 // pred_region
      %s39 = ssub.s32 16, 16
      %40 = vsyncadd [#allocation6], %s39
      %s42 = sshll.u32 [#allocation7], 4
      %s43 = int_to_ptr.vmem [resolvable:$true] %s42
      %45 = dma.hbm_to_vmem [thread:$0]  %s2, 16, %s43, [#allocation6]
    $region13: #{tpu_custom_call.1} parent=1 // pred_fallthru
      _
    // Predicated region
    $region14: #{tpu_custom_call.1} parent=1 // pred_check
      _
    $region15: #{tpu_custom_call.1} parent=1 // pred_check_branch
      %47 = sbr.rel (0) target = $region17
    $region16: #{tpu_custom_call.1} parent=1 // pred_region
      %s49 = ssub.s32 1792, 1792
      %50 = vsyncadd [#allocation9], %s49
      %s51 = sshll.u32 [#allocation8], 4
      %s52 = int_to_ptr.vmem [resolvable:$true] %s51
      %57 = dma.hbm_to_vmem [thread:$0]  %s3, 1792, %s52, [#allocation9], 448, 448, 28
    $region17: #{tpu_custom_call.1} parent=1 // pred_fallthru
      _
    // Predicated region
    $region18: #{tpu_custom_call.1} parent=1 // pred_check
      _
    $region19: #{tpu_custom_call.1} parent=1 // pred_check_branch
      %59 = sbr.rel (0) target = $region21
    $region20: #{tpu_custom_call.1} parent=1 // pred_region
      %s61 = ssub.s32 112, 112
      %62 = vsyncadd [#allocation9], %s61
      %s64 = sshll.u32 [#allocation10], 4
      %s65 = int_to_ptr.vmem [resolvable:$true] %s64
      %67 = dma.hbm_to_vmem [thread:$0]  %s4, 112, %s65, [#allocation9]
    $region21: #{tpu_custom_call.1} parent=1 // pred_fallthru
      _
    // Predicated region
    $region22: #{tpu_custom_call.1} parent=1 // pred_check
      _
    $region23: #{tpu_custom_call.1} parent=1 // pred_check_branch
      %69 = sbr.rel (0) target = $region25
    $region24: #{tpu_custom_call.1} parent=1 // pred_region
      %70 = dma.done [#allocation3], 64
    $region25: #{tpu_custom_call.1} parent=1 // pred_fallthru
      _
    // Predicated region
    $region26: #{tpu_custom_call.1} parent=1 // pred_check
      _
    $region27: #{tpu_custom_call.1} parent=1 // pred_check_branch
      %72 = sbr.rel (0) target = $region29
    $region28: #{tpu_custom_call.1} parent=1 // pred_region
      %73 = dma.done [#allocation6], 256
    $region29: #{tpu_custom_call.1} parent=1 // pred_fallthru
      _
    // Predicated region
    $region30: #{tpu_custom_call.1} parent=1 // pred_check
      _
    $region31: #{tpu_custom_call.1} parent=1 // pred_check_branch
      %75 = sbr.rel (0) target = $region33
    $region32: #{tpu_custom_call.1} parent=1 // pred_region
      %76 = dma.done [#allocation6], 16
    $region33: #{tpu_custom_call.1} parent=1 // pred_fallthru
      _
    // Predicated region
    $region34: #{tpu_custom_call.1} parent=1 // pred_check
      _
    $region35: #{tpu_custom_call.1} parent=1 // pred_check_branch
      %78 = sbr.rel (0) target = $region37
    $region36: #{tpu_custom_call.1} parent=1 // pred_region
      %79 = dma.done [#allocation9], 1792
    $region37: #{tpu_custom_call.1} parent=1 // pred_fallthru
      _
    // Predicated region
    $region38: #{tpu_custom_call.1} parent=1 // pred_check
      _
    $region39: #{tpu_custom_call.1} parent=1 // pred_check_branch
      %81 = sbr.rel (0) target = $region41
    $region40: #{tpu_custom_call.1} parent=1 // pred_region
      %82 = dma.done [#allocation9], 112
    $region41: #{tpu_custom_call.1} parent=1 // pred_fallthru
      _
    %v84 = vld [vmem:[#allocation2] sm:$0xf]
    %v85 = vld [vmem:[#allocation5] sm:$0xf]
    %v86 = vld [vmem:[#allocation5 + $0x4] sm:$0xf]
    %v87 = vld [vmem:[#allocation5 + $0x8] sm:$0xf]
    %v88 = vld [vmem:[#allocation5 + $0xc] sm:$0xf]
    %v89 = vld [vmem:[#allocation7] sm:$0x1]
    %v91 = vlaneseq
    %v92 = vshrl.u32 %v91, 7
    %v93 = vsub.s32 0, %v92
    %v94 = vrot.slane %v89, %v93
    %v100 = vunpack.c.l.b16 %v85
    %v101 = vunpack.c.l.b16 %v86
    %v102 = vunpack.c.l.b16 %v87
    %v103 = vunpack.c.l.b16 %v88
    %v104 = vpack.c.b16 %v101, %v100
    %v105 = vpack.c.b16 %v103, %v102
    %vm108 = vcmask 261120
    %v110 = vsel %vm108, %v84, 0
    %112 = vmatprep.subr.bf16.mxu0 0
    %113 = vmatpush1.bf16.msra.mxu0 %v104
    %114 = vmatprep.subr.bf16.mxu0 0
    %115 = vmatpush1.bf16.msra.mxu0 %v105
    %116 = vmatprep.subr.bf16.mxu0 0
    %117 = vmatpush1.bf16.msra.mxu0 0
    %118 = vmatprep.subr.bf16.mxu0 0
    %119 = vmatpush1.bf16.msra.mxu0 0
    %120 = vmatprep.subr.bf16.mxu0 0
    %121 = vmatpush1.bf16.msra.mxu0 0
    %122 = vmatprep.subr.bf16.mxu0 0
    %123 = vmatpush1.bf16.msra.mxu0 0
    %124 = vmatprep.subr.bf16.mxu0 0
    %125 = vmatpush1.bf16.msra.mxu0 0
    %126 = vmatprep.subr.bf16.mxu0 0
    %127 = vmatpush1.bf16.msra.mxu0 0
    %128 = vmatprep.subr.bf16.mxu0 0
    %129 = vmatpush1.bf16.msra.mxu0 0
    %130 = vmatprep.subr.bf16.mxu0 0
    %131 = vmatpush1.bf16.msra.mxu0 0
    %132 = vmatprep.subr.bf16.mxu0 0
    %133 = vmatpush1.bf16.msra.mxu0 0
    %134 = vmatprep.subr.bf16.mxu0 0
    %135 = vmatpush1.bf16.msra.mxu0 0
    %136 = vmatprep.subr.bf16.mxu0 0
    %137 = vmatpush1.bf16.msra.mxu0 0
    %138 = vmatprep.subr.bf16.mxu0 0
    %139 = vmatpush1.bf16.msra.mxu0 0
    %140 = vmatprep.subr.bf16.mxu0 0
    %141 = vmatpush1.bf16.msra.mxu0 0
    %142 = vmatprep.subr.bf16.mxu0 0
    %143 = vmatpush1.bf16.msra.mxu0 0
    %144 = vmatprep.mubr.bf16.mxu0 0
    %145 = vmatmul.mubr.bf16.gmra.mrb[0].mxu0 %v110
    %v146 = vpop.f32.mrb[0].mxu0
    %v147 = vadd.f32 %v94, %v146
    %v148 = vpop.f32.mrb[0].mxu0
    %v149 = vpop.f32.mrb[0].mxu0
    %v150 = vpop.f32.mrb[0].mxu0
    %151 = vdwg.mxu0
    %v152 = vtanh.pop %v147
    %v153 = vpack.c.bf16 %v152, %v152
    %v154 = vld [vmem:[#allocation8] sm:$0xff]
    %v155 = vld [vmem:[#allocation8 + $0x8] sm:$0xff]
    %v156 = vld [vmem:[#allocation8 + $0x10] sm:$0xff]
    %v157 = vld [vmem:[#allocation8 + $0x18] sm:$0xf]
    %v158 = vld [vmem:[#allocation8 + $0x1c] sm:$0xff]
    %v159 = vld [vmem:[#allocation8 + $0x24] sm:$0xff]
    %v160 = vld [vmem:[#allocation8 + $0x2c] sm:$0xff]
    %v161 = vld [vmem:[#allocation8 + $0x34] sm:$0xf]
    %v162 = vld [vmem:[#allocation8 + $0x38] sm:$0xff]
    %v163 = vld [vmem:[#allocation8 + $0x40] sm:$0xff]
    %v164 = vld [vmem:[#allocation8 + $0x48] sm:$0xff]
    %v165 = vld [vmem:[#allocation8 + $0x50] sm:$0xf]
    %v166 = vld [vmem:[#allocation8 + $0x54] sm:$0xff]
    %v167 = vld [vmem:[#allocation8 + $0x5c] sm:$0xff]
    %v168 = vld [vmem:[#allocation8 + $0x64] sm:$0xff]
    %v169 = vld [vmem:[#allocation8 + $0x6c] sm:$0xf]
    %v170 = vld [vmem:[#allocation10] sm:$0xff]
    %v172 = vlaneseq
    %v173 = vshrl.u32 %v172, 7
    %v174 = vsub.s32 0, %v173
    %v175 = vrot.slane %v170, %v174
    %v176 = vlaneseq
    %v177 = vshrl.u32 %v176, 7
    %v178 = vsub.s32 1, %v177
    %v179 = vrot.slane %v170, %v178
    %v180 = vlaneseq
    %v181 = vshrl.u32 %v180, 7
    %v182 = vsub.s32 2, %v181
    %v183 = vrot.slane %v170, %v182
    %v184 = vlaneseq
    %v185 = vshrl.u32 %v184, 7
    %v186 = vsub.s32 3, %v185
    %v187 = vrot.slane %v170, %v186
    %v188 = vlaneseq
    %v189 = vshrl.u32 %v188, 7
    %v190 = vsub.s32 4, %v189
    %v191 = vrot.slane %v170, %v190
    %v192 = vlaneseq
    %v193 = vshrl.u32 %v192, 7
    %v194 = vsub.s32 5, %v193
    %v195 = vrot.slane %v170, %v194
    %v196 = vlaneseq
    %v197 = vshrl.u32 %v196, 7
    %v198 = vsub.s32 6, %v197
    %v199 = vrot.slane %v170, %v198
    %v223 = vunpack.c.l.b16 %v154
    %v224 = vunpack.c.h.b16 %v154
    %v225 = vunpack.c.l.b16 %v155
    %v226 = vunpack.c.h.b16 %v155
    %v227 = vunpack.c.l.b16 %v156
    %v228 = vunpack.c.h.b16 %v156
    %v229 = vunpack.c.l.b16 %v157
    %v230 = vunpack.c.l.b16 %v158
    %v231 = vunpack.c.h.b16 %v158
    %v232 = vunpack.c.l.b16 %v159
    %v233 = vunpack.c.h.b16 %v159
    %v234 = vunpack.c.l.b16 %v160
    %v235 = vunpack.c.h.b16 %v160
    %v236 = vunpack.c.l.b16 %v161
    %v237 = vunpack.c.l.b16 %v162
    %v238 = vunpack.c.h.b16 %v162
    %v239 = vunpack.c.l.b16 %v163
    %v240 = vunpack.c.h.b16 %v163
    %v241 = vunpack.c.l.b16 %v164
    %v242 = vunpack.c.h.b16 %v164
    %v243 = vunpack.c.l.b16 %v165
    %v244 = vunpack.c.l.b16 %v166
    %v245 = vunpack.c.h.b16 %v166
    %v246 = vunpack.c.l.b16 %v167
    %v247 = vunpack.c.h.b16 %v167
    %v248 = vunpack.c.l.b16 %v168
    %v249 = vunpack.c.h.b16 %v168
    %v250 = vunpack.c.l.b16 %v169
    %v251 = vpack.c.b16 %v230, %v223
    %v252 = vpack.c.b16 %v231, %v224
    %v253 = vpack.c.b16 %v232, %v225
    %v254 = vpack.c.b16 %v233, %v226
    %v255 = vpack.c.b16 %v234, %v227
    %v256 = vpack.c.b16 %v235, %v228
    %v257 = vpack.c.b16 %v236, %v229
    %v258 = vpack.c.b16 %v244, %v237
    %v259 = vpack.c.b16 %v245, %v238
    %v260 = vpack.c.b16 %v246, %v239
    %v261 = vpack.c.b16 %v247, %v240
    %v262 = vpack.c.b16 %v248, %v241
    %v263 = vpack.c.b16 %v249, %v242
    %v264 = vpack.c.b16 %v250, %v243
    %v280 = vsel %vm108, %v153, 0
    %282 = vmatprep.subr.bf16.mxu0 %v252
    %283 = vmatpush1.bf16.msra.mxu0 %v251
    %284 = vmatprep.subr.bf16.mxu0 %v259
    %285 = vmatpush1.bf16.msra.mxu0 %v258
    %286 = vmatprep.subr.bf16.mxu0 0
    %287 = vmatpush1.bf16.msra.mxu0 0
    %288 = vmatprep.subr.bf16.mxu0 0
    %289 = vmatpush1.bf16.msra.mxu0 0
    %290 = vmatprep.subr.bf16.mxu0 0
    %291 = vmatpush1.bf16.msra.mxu0 0
    %292 = vmatprep.subr.bf16.mxu0 0
    %293 = vmatpush1.bf16.msra.mxu0 0
    %294 = vmatprep.subr.bf16.mxu0 0
    %295 = vmatpush1.bf16.msra.mxu0 0
    %296 = vmatprep.subr.bf16.mxu0 0
    %297 = vmatpush1.bf16.msra.mxu0 0
    %298 = vmatprep.subr.bf16.mxu0 0
    %299 = vmatpush1.bf16.msra.mxu0 0
    %300 = vmatprep.subr.bf16.mxu0 0
    %301 = vmatpush1.bf16.msra.mxu0 0
    %302 = vmatprep.subr.bf16.mxu0 0
    %303 = vmatpush1.bf16.msra.mxu0 0
    %304 = vmatprep.subr.bf16.mxu0 0
    %305 = vmatpush1.bf16.msra.mxu0 0
    %306 = vmatprep.subr.bf16.mxu0 0
    %307 = vmatpush1.bf16.msra.mxu0 0
    %308 = vmatprep.subr.bf16.mxu0 0
    %309 = vmatpush1.bf16.msra.mxu0 0
    %310 = vmatprep.subr.bf16.mxu0 0
    %311 = vmatpush1.bf16.msra.mxu0 0
    %312 = vmatprep.subr.bf16.mxu0 0
    %313 = vmatpush1.bf16.msra.mxu0 0
    %314 = vmatprep.mubr.bf16.mxu0 0
    %315 = vmatmul.mubr.bf16.gmra.mrb[0].mxu0 %v280
    %v316 = vpop.f32.mrb[0].mxu0
    %v317 = vadd.f32 %v175, %v316
    %v318 = vpop.f32.mrb[0].mxu0
    %v319 = vadd.f32 %v179, %v318
    %v320 = vpop.f32.mrb[0].mxu0
    %v321 = vpop.f32.mrb[0].mxu0
    %322 = vdwg.mxu0
    %323 = vmatprep.subr.bf16.mxu0 %v254
    %324 = vmatpush1.bf16.msra.mxu0 %v253
    %325 = vmatprep.subr.bf16.mxu0 %v261
    %326 = vmatpush1.bf16.msra.mxu0 %v260
    %327 = vmatprep.subr.bf16.mxu0 0
    %328 = vmatpush1.bf16.msra.mxu0 0
    %329 = vmatprep.subr.bf16.mxu0 0
    %330 = vmatpush1.bf16.msra.mxu0 0
    %331 = vmatprep.subr.bf16.mxu0 0
    %332 = vmatpush1.bf16.msra.mxu0 0
    %333 = vmatprep.subr.bf16.mxu0 0
    %334 = vmatpush1.bf16.msra.mxu0 0
    %335 = vmatprep.subr.bf16.mxu0 0
    %336 = vmatpush1.bf16.msra.mxu0 0
    %337 = vmatprep.subr.bf16.mxu0 0
    %338 = vmatpush1.bf16.msra.mxu0 0
    %339 = vmatprep.subr.bf16.mxu0 0
    %340 = vmatpush1.bf16.msra.mxu0 0
    %341 = vmatprep.subr.bf16.mxu0 0
    %342 = vmatpush1.bf16.msra.mxu0 0
    %343 = vmatprep.subr.bf16.mxu0 0
    %344 = vmatpush1.bf16.msra.mxu0 0
    %345 = vmatprep.subr.bf16.mxu0 0
    %346 = vmatpush1.bf16.msra.mxu0 0
    %347 = vmatprep.subr.bf16.mxu0 0
    %348 = vmatpush1.bf16.msra.mxu0 0
    %349 = vmatprep.subr.bf16.mxu0 0
    %350 = vmatpush1.bf16.msra.mxu0 0
    %351 = vmatprep.subr.bf16.mxu0 0
    %352 = vmatpush1.bf16.msra.mxu0 0
    %353 = vmatprep.subr.bf16.mxu0 0
    %354 = vmatpush1.bf16.msra.mxu0 0
    %355 = vmatprep.mubr.bf16.mxu0 0
    %356 = vmatmul.mubr.bf16.gmra.mrb[0].mxu0 %v280
    %v357 = vpop.f32.mrb[0].mxu0
    %v358 = vadd.f32 %v183, %v357
    %v359 = vpop.f32.mrb[0].mxu0
    %v360 = vadd.f32 %v187, %v359
    %v361 = vpop.f32.mrb[0].mxu0
    %v362 = vpop.f32.mrb[0].mxu0
    %363 = vdwg.mxu0
    %364 = vmatprep.subr.bf16.mxu0 %v256
    %365 = vmatpush1.bf16.msra.mxu0 %v255
    %366 = vmatprep.subr.bf16.mxu0 %v263
    %367 = vmatpush1.bf16.msra.mxu0 %v262
    %368 = vmatprep.subr.bf16.mxu0 0
    %369 = vmatpush1.bf16.msra.mxu0 0
    %370 = vmatprep.subr.bf16.mxu0 0
    %371 = vmatpush1.bf16.msra.mxu0 0
    %372 = vmatprep.subr.bf16.mxu0 0
    %373 = vmatpush1.bf16.msra.mxu0 0
    %374 = vmatprep.subr.bf16.mxu0 0
    %375 = vmatpush1.bf16.msra.mxu0 0
    %376 = vmatprep.subr.bf16.mxu0 0
    %377 = vmatpush1.bf16.msra.mxu0 0
    %378 = vmatprep.subr.bf16.mxu0 0
    %379 = vmatpush1.bf16.msra.mxu0 0
    %380 = vmatprep.subr.bf16.mxu0 0
    %381 = vmatpush1.bf16.msra.mxu0 0
    %382 = vmatprep.subr.bf16.mxu0 0
    %383 = vmatpush1.bf16.msra.mxu0 0
    %384 = vmatprep.subr.bf16.mxu0 0
    %385 = vmatpush1.bf16.msra.mxu0 0
    %386 = vmatprep.subr.bf16.mxu0 0
    %387 = vmatpush1.bf16.msra.mxu0 0
    %388 = vmatprep.subr.bf16.mxu0 0
    %389 = vmatpush1.bf16.msra.mxu0 0
    %390 = vmatprep.subr.bf16.mxu0 0
    %391 = vmatpush1.bf16.msra.mxu0 0
    %392 = vmatprep.subr.bf16.mxu0 0
    %393 = vmatpush1.bf16.msra.mxu0 0
    %394 = vmatprep.subr.bf16.mxu0 0
    %395 = vmatpush1.bf16.msra.mxu0 0
    %396 = vmatprep.mubr.bf16.mxu0 0
    %397 = vmatmul.mubr.bf16.gmra.mrb[0].mxu0 %v280
    %v398 = vpop.f32.mrb[0].mxu0
    %v399 = vadd.f32 %v191, %v398
    %v400 = vpop.f32.mrb[0].mxu0
    %v401 = vadd.f32 %v195, %v400
    %v402 = vpop.f32.mrb[0].mxu0
    %v403 = vpop.f32.mrb[0].mxu0
    %404 = vdwg.mxu0
    %405 = vmatprep.subr.bf16.mxu0 0
    %406 = vmatpush1.bf16.msra.mxu0 %v257
    %407 = vmatprep.subr.bf16.mxu0 0
    %408 = vmatpush1.bf16.msra.mxu0 %v264
    %409 = vmatprep.subr.bf16.mxu0 0
    %410 = vmatpush1.bf16.msra.mxu0 0
    %411 = vmatprep.subr.bf16.mxu0 0
    %412 = vmatpush1.bf16.msra.mxu0 0
    %413 = vmatprep.subr.bf16.mxu0 0
    %414 = vmatpush1.bf16.msra.mxu0 0
    %415 = vmatprep.subr.bf16.mxu0 0
    %416 = vmatpush1.bf16.msra.mxu0 0
    %417 = vmatprep.subr.bf16.mxu0 0
    %418 = vmatpush1.bf16.msra.mxu0 0
    %419 = vmatprep.subr.bf16.mxu0 0
    %420 = vmatpush1.bf16.msra.mxu0 0
    %421 = vmatprep.subr.bf16.mxu0 0
    %422 = vmatpush1.bf16.msra.mxu0 0
    %423 = vmatprep.subr.bf16.mxu0 0
    %424 = vmatpush1.bf16.msra.mxu0 0
    %425 = vmatprep.subr.bf16.mxu0 0
    %426 = vmatpush1.bf16.msra.mxu0 0
    %427 = vmatprep.subr.bf16.mxu0 0
    %428 = vmatpush1.bf16.msra.mxu0 0
    %429 = vmatprep.subr.bf16.mxu0 0
    %430 = vmatpush1.bf16.msra.mxu0 0
    %431 = vmatprep.subr.bf16.mxu0 0
    %432 = vmatpush1.bf16.msra.mxu0 0
    %433 = vmatprep.subr.bf16.mxu0 0
    %434 = vmatpush1.bf16.msra.mxu0 0
    %435 = vmatprep.subr.bf16.mxu0 0
    %436 = vmatpush1.bf16.msra.mxu0 0
    %437 = vmatprep.mubr.bf16.mxu0 0
    %438 = vmatmul.mubr.bf16.gmra.mrb[0].mxu0 %v280
    %v439 = vpop.f32.mrb[0].mxu0
    %v440 = vadd.f32 %v199, %v439
    %v441 = vpop.f32.mrb[0].mxu0
    %v442 = vpop.f32.mrb[0].mxu0
    %v443 = vpop.f32.mrb[0].mxu0
    %444 = vdwg.mxu0
    %v445 = vxor.u32 %v317, 2147483648
    %v446 = vxor.u32 %v319, 2147483648
    %v447 = vxor.u32 %v358, 2147483648
    %v448 = vxor.u32 %v360, 2147483648
    %v449 = vxor.u32 %v399, 2147483648
    %v450 = vxor.u32 %v401, 2147483648
    %v451 = vxor.u32 %v440, 2147483648
    %v452 = vmul.f32 %v445, 1.442695
    %v453 = vpow.pop %v452
    %v454 = vmul.f32 %v446, 1.442695
    %v455 = vpow.pop %v454
    %v456 = vmul.f32 %v447, 1.442695
    %v457 = vpow.pop %v456
    %v458 = vmul.f32 %v448, 1.442695
    %v459 = vpow.pop %v458
    %v460 = vmul.f32 %v449, 1.442695
    %v461 = vpow.pop %v460
    %v462 = vmul.f32 %v450, 1.442695
    %v463 = vpow.pop %v462
    %v464 = vmul.f32 %v451, 1.442695
    %v465 = vpow.pop %v464
    %v466 = vadd.f32 %v453, 1.0
    %v467 = vadd.f32 %v455, 1.0
    %v468 = vadd.f32 %v457, 1.0
    %v469 = vadd.f32 %v459, 1.0
    %v470 = vadd.f32 %v461, 1.0
    %v471 = vadd.f32 %v463, 1.0
    %v472 = vadd.f32 %v465, 1.0
    %v473 = vrcp.pop %v466
    %v474 = vmul.f32 1.0, %v473
    %v475 = vrcp.pop %v467
    %v476 = vmul.f32 1.0, %v475
    %v477 = vrcp.pop %v468
    %v478 = vmul.f32 1.0, %v477
    %v479 = vrcp.pop %v469
    %v480 = vmul.f32 1.0, %v479
    %v481 = vrcp.pop %v470
    %v482 = vmul.f32 1.0, %v481
    %v483 = vrcp.pop %v471
    %v484 = vmul.f32 1.0, %v483
    %v485 = vrcp.pop %v472
    %v486 = vmul.f32 1.0, %v485
    %487 = vst [vmem:[#allocation11] sm:$0xff] %v474
    %488 = vst [vmem:[#allocation11 + $0x8] sm:$0xff] %v476
    %489 = vst [vmem:[#allocation11 + $0x10] sm:$0xff] %v478
    %490 = vst [vmem:[#allocation11 + $0x18] sm:$0xff] %v480
    %491 = vst [vmem:[#allocation11 + $0x20] sm:$0xff] %v482
    %492 = vst [vmem:[#allocation11 + $0x28] sm:$0xff] %v484
    %493 = vst [vmem:[#allocation11 + $0x30] sm:$0xff] %v486
    // Predicated region
    $region42: #{tpu_custom_call.1} parent=1 // pred_check
      _
    $region43: #{tpu_custom_call.1} parent=1 // pred_check_branch
      %495 = sbr.rel (0) target = $region45
    $region44: #{tpu_custom_call.1} parent=1 // pred_region
      %s497 = ssub.s32 896, 896
      %498 = vsyncadd [#allocation4], %s497
      %s500 = sshll.u32 [#allocation11], 4
      %s501 = int_to_ptr.vmem [resolvable:$true] %s500
      %503 = dma.vmem_to_hbm [thread:$0]  %s501, 896, %s5, [#allocation4]
    $region45: #{tpu_custom_call.1} parent=1 // pred_fallthru
      _
    // Predicated region
    $region46: #{tpu_custom_call.1} parent=1 // pred_check
      _
    $region47: #{tpu_custom_call.1} parent=1 // pred_check_branch
      %505 = sbr.rel (0) target = $region49
    $region48: #{tpu_custom_call.1} parent=1 // pred_region
      %506 = dma.done [#allocation4], 896
    $region49: #{tpu_custom_call.1} parent=1 // pred_fallthru
      _
    %507 = vsyncpa [#allocation3], 1
    %508 = vsyncpa [#allocation6], 1
    %509 = vsyncpa [#allocation9], 1
    %510 = vsyncpa [#allocation4], 1

</llo_original>
